<compile_context>
chip_gen: v7x
topology: tpu7x:2x2x1
jax: 0.10.0
libtpu: 0.0.40
codegen_flags: <defaults>
</compile_context>

<pallas_src>
import math
import jax
import jax.numpy as jnp
from jax.experimental import pallas as pl
from jax.experimental.pallas import tpu as pltpu

NUM_INPUTS = 2      # env.observation_space.shape[0]
HIDDEN = 64         # hidden_layer
NUM_OUTPUTS = 3     # env.action_space.n (discrete ball-beam actions)
LANE = 128          # lane-dense padded output width (one full vreg lane span)


def mlp_kernel(x_ref, w1_ref, b1_ref, w2p_ref, b2p_ref, o_ref):
    x = x_ref[...]                                   # (TILE_B, 2)  f32
    w1 = w1_ref[...]                                 # (2, HIDDEN)  f32
    # Layer 1 on the VPU: K=2, so two broadcast multiply-adds beat an MXU
    # matmul that would be ~99% zero padding (and avoid the result-FIFO pop).
    h = x[:, 0:1] * w1[0:1, :] + x[:, 1:2] * w1[1:2, :] + b1_ref[...]
    h = jnp.maximum(h, 0.0)                          # ReLU
    # Layer 2 on the MXU with lane-dense (128-wide, zero-padded) weights so
    # the result is a clean full-lane vreg tile and the store is unmasked.
    out = jnp.dot(h, w2p_ref[...], preferred_element_type=jnp.float32) + b2p_ref[...]
    o_ref[...] = out


def mlp_forward(x, w1, b1, w2, b2, *, tile_b=256):
    """x: (batch, 2) f32; w1: (2, 64); b1: (1, 64); w2: (64, 3); b2: (1, 3)."""
    batch = x.shape[0]

    # Zero-pad layer-2 params to a lane-dense 128-wide output (~32 KB, trivial).
    w2p = jnp.zeros((HIDDEN, LANE), jnp.float32).at[:, :NUM_OUTPUTS].set(w2)
    b2p = jnp.zeros((1, LANE), jnp.float32).at[:, :NUM_OUTPUTS].set(b2)

    # Batch tiling: shrink the tile for tiny batches (multiple of 8 sublanes),
    # and round the batch up so every grid step stores a full block.
    tile_b = min(tile_b, max(8, ((batch + 7) // 8) * 8))
    padded_batch = ((batch + tile_b - 1) // tile_b) * tile_b
    if padded_batch != batch:
        x = jnp.pad(x, ((0, padded_batch - batch), (0, 0)))

    out = pl.pallas_call(
        mlp_kernel,
        out_shape=jax.ShapeDtypeStruct((padded_batch, LANE), jnp.float32),
        grid=(padded_batch // tile_b,),
        in_specs=[
            pl.BlockSpec((tile_b, NUM_INPUTS), lambda i: (i, 0)),
            pl.BlockSpec((NUM_INPUTS, HIDDEN), lambda i: (0, 0),
                         memory_space=pltpu.MemorySpace.VMEM),
            pl.BlockSpec((1, HIDDEN), lambda i: (0, 0),
                         memory_space=pltpu.MemorySpace.VMEM),
            pl.BlockSpec((HIDDEN, LANE), lambda i: (0, 0),
                         memory_space=pltpu.MemorySpace.VMEM),
            pl.BlockSpec((1, LANE), lambda i: (0, 0),
                         memory_space=pltpu.MemorySpace.VMEM),
        ],
        out_specs=pl.BlockSpec((tile_b, LANE), lambda i: (i, 0)),
        compiler_params=pltpu.CompilerParams(
            # Batch tiles are independent -> shard across both TCs on v7x.
            dimension_semantics=("parallel",)),
    )(x, w1, b1, w2p, b2p)

    # Slice back to the logical (batch, 3) logits.
    return out[:batch, :NUM_OUTPUTS]


def init_params(key):
    """Deterministic init mimicking PyTorch nn.Linear default U(-1/sqrt(fan_in), 1/sqrt(fan_in))."""
    k1, k2, k3, k4 = jax.random.split(key, 4)
    bound1 = 1.0 / math.sqrt(NUM_INPUTS)
    bound2 = 1.0 / math.sqrt(HIDDEN)
    w1 = jax.random.uniform(k1, (NUM_INPUTS, HIDDEN), jnp.float32, -bound1, bound1)
    b1 = jax.random.uniform(k2, (1, HIDDEN), jnp.float32, -bound1, bound1)
    w2 = jax.random.uniform(k3, (HIDDEN, NUM_OUTPUTS), jnp.float32, -bound2, bound2)
    b2 = jax.random.uniform(k4, (1, NUM_OUTPUTS), jnp.float32, -bound2, bound2)
    return w1, b1, w2, b2


if __name__ == "__main__":
    key = jax.random.PRNGKey(0)
    k_params, k_x = jax.random.split(key)

    w1, b1, w2, b2 = init_params(k_params)

    batch = 16  # small batch of observations; each obs is (position, setpoint)
    x = jax.random.normal(k_x, (batch, NUM_INPUTS), dtype=jnp.float32)

    fwd = jax.jit(mlp_forward)
    out = jax.block_until_ready(fwd(x, w1, b1, w2, b2))

    # Pure-JAX reference of the same forward pass (un-padded weights).
    ref = jnp.maximum(x @ w1 + b1, 0.0) @ w2 + b2
    assert out.shape == (batch, NUM_OUTPUTS)
    assert jnp.allclose(out, ref, atol=1e-5, rtol=1e-5)

    print("KERNEL_OK")
</pallas_src>

<mosaic_0001>
module attributes {stable_mosaic.version = 11 : i64} {
  func.func @mlp_kernel(%arg0: i32, %arg1: memref<16x2xf32, #tpu.memory_space<vmem>>, %arg2: memref<2x64xf32, #tpu.memory_space<vmem>>, %arg3: memref<1x64xf32, #tpu.memory_space<vmem>>, %arg4: memref<64x128xf32, #tpu.memory_space<vmem>>, %arg5: memref<1x128xf32, #tpu.memory_space<vmem>>, %arg6: memref<16x128xf32, #tpu.memory_space<vmem>>) attributes {dimension_semantics = [#tpu.dimension_semantics<parallel>], iteration_bounds = array<i64: 1>, scalar_prefetch = 0 : i64, scratch_operands = 0 : i64, tpu.core_type = #tpu.core_type<tc>, window_params = [{transform_indices = @transform_0, window_bounds = array<i64: 16, 2>}, {pipeline_mode = #tpu.pipeline_mode<synchronous>, transform_indices = @transform_1, window_bounds = array<i64: 2, 64>}, {pipeline_mode = #tpu.pipeline_mode<synchronous>, transform_indices = @transform_2, window_bounds = array<i64: 1, 64>}, {pipeline_mode = #tpu.pipeline_mode<synchronous>, transform_indices = @transform_3, window_bounds = array<i64: 64, 128>}, {pipeline_mode = #tpu.pipeline_mode<synchronous>, transform_indices = @transform_4, window_bounds = array<i64: 1, 128>}, {transform_indices = @transform_5, window_bounds = array<i64: 16, 128>}]} {
    %c0 = arith.constant 0 : index
    %c0_0 = arith.constant 0 : index
    %0 = vector.load %arg1[%c0, %c0_0] : memref<16x2xf32, #tpu.memory_space<vmem>>, vector<16x2xf32>
    %c0_1 = arith.constant 0 : index
    %c0_2 = arith.constant 0 : index
    %1 = vector.load %arg2[%c0_1, %c0_2] : memref<2x64xf32, #tpu.memory_space<vmem>>, vector<2x64xf32>
    %2 = vector.extract_strided_slice %0 {offsets = [0, 0], sizes = [16, 1], strides = [1, 1]} : vector<16x2xf32> to vector<16x1xf32>
    %3 = vector.extract_strided_slice %1 {offsets = [0, 0], sizes = [1, 64], strides = [1, 1]} : vector<2x64xf32> to vector<1x64xf32>
    %4 = vector.broadcast %2 : vector<16x1xf32> to vector<16x64xf32>
    %5 = vector.broadcast %3 : vector<1x64xf32> to vector<16x64xf32>
    %6 = arith.mulf %4, %5 : vector<16x64xf32>
    %7 = vector.extract_strided_slice %0 {offsets = [0, 1], sizes = [16, 1], strides = [1, 1]} : vector<16x2xf32> to vector<16x1xf32>
    %8 = vector.extract_strided_slice %1 {offsets = [1, 0], sizes = [1, 64], strides = [1, 1]} : vector<2x64xf32> to vector<1x64xf32>
    %9 = vector.broadcast %7 : vector<16x1xf32> to vector<16x64xf32>
    %10 = vector.broadcast %8 : vector<1x64xf32> to vector<16x64xf32>
    %11 = arith.mulf %9, %10 : vector<16x64xf32>
    %12 = arith.addf %6, %11 : vector<16x64xf32>
    %c0_3 = arith.constant 0 : index
    %c0_4 = arith.constant 0 : index
    %13 = vector.load %arg3[%c0_3, %c0_4] : memref<1x64xf32, #tpu.memory_space<vmem>>, vector<1x64xf32>
    %14 = vector.broadcast %13 : vector<1x64xf32> to vector<16x64xf32>
    %15 = arith.addf %12, %14 : vector<16x64xf32>
    %cst = arith.constant 0.000000e+00 : f32
    %16 = vector.broadcast %cst : f32 to vector<16x64xf32>
    %17 = arith.maximumf %15, %16 : vector<16x64xf32>
    %c0_5 = arith.constant 0 : index
    %c0_6 = arith.constant 0 : index
    %18 = vector.load %arg4[%c0_5, %c0_6] : memref<64x128xf32, #tpu.memory_space<vmem>>, vector<64x128xf32>
    %cst_7 = arith.constant dense<0.000000e+00> : vector<16x128xf32>
    %19 = tpu.matmul %17, %18, %cst_7 {dimension_numbers = #tpu.dot_dimension_numbers<[1], [0], [0], [1], [0, 0, 1, 1], [], []>} : vector<16x64xf32>, vector<64x128xf32>, vector<16x128xf32> -> vector<16x128xf32>
    %c0_8 = arith.constant 0 : index
    %c0_9 = arith.constant 0 : index
    %20 = vector.load %arg5[%c0_8, %c0_9] : memref<1x128xf32, #tpu.memory_space<vmem>>, vector<1x128xf32>
    %21 = vector.broadcast %20 : vector<1x128xf32> to vector<16x128xf32>
    %22 = arith.addf %19, %21 : vector<16x128xf32>
    %c0_10 = arith.constant 0 : index
    %c0_11 = arith.constant 0 : index
    %23 = vector.load %arg6[%c0_10, %c0_11] : memref<16x128xf32, #tpu.memory_space<vmem>>, vector<16x128xf32>
    tpu.vector_store %arg6[%c0_10, %c0_11], %22 {strides = array<i32>} : memref<16x128xf32, #tpu.memory_space<vmem>>, vector<16x128xf32>,
    return
  }
  func.func @transform_0(%arg0: i32) -> (i32, i32) {
    %c0_i32 = arith.constant 0 : i32
    %c0_i32_0 = arith.constant 0 : i32
    return %arg0, %c0_i32 : i32, i32
  }
  func.func @transform_1(%arg0: i32) -> (i32, i32) {
    %c0_i32 = arith.constant 0 : i32
    %c0_i32_0 = arith.constant 0 : i32
    %c0_i32_1 = arith.constant 0 : i32
    return %c0_i32, %c0_i32_0 : i32, i32
  }
  func.func @transform_2(%arg0: i32) -> (i32, i32) {
    %c0_i32 = arith.constant 0 : i32
    %c0_i32_0 = arith.constant 0 : i32
    %c0_i32_1 = arith.constant 0 : i32
    return %c0_i32, %c0_i32_0 : i32, i32
  }
  func.func @transform_3(%arg0: i32) -> (i32, i32) {
    %c0_i32 = arith.constant 0 : i32
    %c0_i32_0 = arith.constant 0 : i32
    %c0_i32_1 = arith.constant 0 : i32
    return %c0_i32, %c0_i32_0 : i32, i32
  }
  func.func @transform_4(%arg0: i32) -> (i32, i32) {
    %c0_i32 = arith.constant 0 : i32
    %c0_i32_0 = arith.constant 0 : i32
    %c0_i32_1 = arith.constant 0 : i32
    return %c0_i32, %c0_i32_0 : i32, i32
  }
  func.func @transform_5(%arg0: i32) -> (i32, i32) {
    %c0_i32 = arith.constant 0 : i32
    %c0_i32_0 = arith.constant 0 : i32
    return %arg0, %c0_i32 : i32, i32
  }
}

</mosaic_0001>

<llo_original>
// kernel: mlp_forward.1
$region0: #{mlp_forward.1}
  #allocation0 [shape = 'u32[]', space=smem, size = 0x4, offset = 0x4, fixed_abs, tag = 'smem constant byte address 0x4 - core index']
  #allocation1 [shape = 'u32[144,128]{1,0:T(1,128)}', space=vmem, size = 0x12000, scoped, tag = 'internal scratch']
  %s0 = inlined_call_operand.vmem [shape: f32[16,2], index: 0, kind: input, shape index: {}]
  %s1 = inlined_call_operand.vmem [shape: f32[2,64], index: 1, kind: input, shape index: {}]
  %s2 = inlined_call_operand.vmem [shape: f32[1,64], index: 2, kind: input, shape index: {}]
  %s3 = inlined_call_operand.vmem [shape: f32[64,128], index: 3, kind: input, shape index: {}]
  %s4 = inlined_call_operand.vmem [shape: f32[1,128], index: 4, kind: input, shape index: {}]
  %s5 = inlined_call_operand.vmem [shape: f32[16,128], index: 5, kind: output, shape index: {}]
  %s6 = sld [smem:[#allocation0]]
  $region30: #{mlp_forward.1} parent=0
    _
  %s8 = ssub.s32 1, %s6
  %s9 = scalar_select 0, %s8, %s6
  // Predicated region
  $region2: #{mlp_forward.1} parent=0 // pred_check
    _
  $region3: #{mlp_forward.1} parent=0 // pred_check_branch
    %11 = sbr.rel (0) target = $region5
  $region4: #{mlp_forward.1} parent=0 // pred_region
    _
  $region5: #{mlp_forward.1} parent=0 // pred_fallthru
    _
  // Predicated region
  $region6: #{mlp_forward.1} parent=0 // pred_check
    _
  $region7: #{mlp_forward.1} parent=0 // pred_check_branch
    %13 = sbr.rel (0) target = $region9
  $region8: #{mlp_forward.1} parent=0 // pred_region
    _
  $region9: #{mlp_forward.1} parent=0 // pred_fallthru
    _
  // Predicated region
  $region10: #{mlp_forward.1} parent=0 // pred_check
    _
  $region11: #{mlp_forward.1} parent=0 // pred_check_branch
    %15 = sbr.rel (0) target = $region13
  $region12: #{mlp_forward.1} parent=0 // pred_region
    _
  $region13: #{mlp_forward.1} parent=0 // pred_fallthru
    _
  // Predicated region
  $region14: #{mlp_forward.1} parent=0 // pred_check
    _
  $region15: #{mlp_forward.1} parent=0 // pred_check_branch
    %17 = sbr.rel (0) target = $region17
  $region16: #{mlp_forward.1} parent=0 // pred_region
    _
  $region17: #{mlp_forward.1} parent=0 // pred_fallthru
    _
  // Predicated region
  $region18: #{mlp_forward.1} parent=0 // pred_check
    _
  $region19: #{mlp_forward.1} parent=0 // pred_check_branch
    %19 = sbr.rel (0) target = $region21
  $region20: #{mlp_forward.1} parent=0 // pred_region
    _
  $region21: #{mlp_forward.1} parent=0 // pred_fallthru
    _
  %v20 = vld [vmem:[%s0] sm:$0xff]
  %v21 = vld [vmem:[%s0 + $0x8] sm:$0xff]
  %v22 = vld [vmem:[%s1] sm:$0x3]
  %24 = vset.pattern.permute.xlu0 0
  %25 = vperm.xlu0 %24, %v20
  %v26 = vpop.permute.xlu0 %25
  %29 = vset.pattern.permute.xlu0 0
  %30 = vperm.xlu0 %29, %v21
  %v31 = vpop.permute.xlu0 %30
  %v33 = vlaneseq
  %v34 = vshrl.u32 %v33, 7
  %v35 = vsub.s32 0, %v34
  %v36 = vrot.slane %v22, %v35
  %v37 = vmul.f32 %v26, %v36
  %v38 = vmul.f32 %v31, %v36
  %39 = vset.pattern.permute.xlu0 1
  %40 = vperm.xlu0 %39, %v20
  %v41 = vpop.permute.xlu0 %40
  %43 = vset.pattern.permute.xlu0 1
  %44 = vperm.xlu0 %43, %v21
  %v45 = vpop.permute.xlu0 %44
  %v47 = vlaneseq
  %v48 = vshrl.u32 %v47, 7
  %v49 = vsub.s32 1, %v48
  %v50 = vrot.slane %v22, %v49
  %v51 = vmul.f32 %v41, %v50
  %v52 = vmul.f32 %v45, %v50
  %v53 = vadd.f32 %v37, %v51
  %v54 = vadd.f32 %v38, %v52
  %v55 = vld [vmem:[%s2] sm:$0x1]
  %v57 = vlaneseq
  %v58 = vshrl.u32 %v57, 7
  %v59 = vsub.s32 0, %v58
  %v60 = vrot.slane %v55, %v59
  %v62 = vadd.f32 %v53, %v60
  %v63 = vadd.f32 %v54, %v60
  %v64 = vmax.f32 %v62, 0.0
  %v65 = vmax.f32 %v63, 0.0
  %v66 = vld [vmem:[%s3] sm:$0xff]
  %v67 = vld [vmem:[%s3 + $0x8] sm:$0xff]
  %v68 = vld [vmem:[%s3 + $0x10] sm:$0xff]
  %v69 = vld [vmem:[%s3 + $0x18] sm:$0xff]
  %v70 = vld [vmem:[%s3 + $0x20] sm:$0xff]
  %v71 = vld [vmem:[%s3 + $0x28] sm:$0xff]
  %v72 = vld [vmem:[%s3 + $0x30] sm:$0xff]
  %v73 = vld [vmem:[%s3 + $0x38] sm:$0xff]
  %v74 = vld [vmem:[%s4] sm:$0x1]
  %v76 = vlaneseq
  %v77 = vshrl.u32 %v76, 7
  %v78 = vsub.s32 0, %v77
  %v79 = vrot.slane %v74, %v78
  %vm81 = vcmask 523264
  %v83 = vsel %vm81, %v64, 0
  %v86 = vsel %vm81, %v65, 0
  %88 = vmatprep.subr.mxu0 0.0
  %89 = vmatpush1.msra.mxu0 %v66
  %90 = vmatprep.subr.mxu0 0.0
  %91 = vmatpush1.msra.mxu0 %v67
  %92 = vmatprep.subr.mxu0 0.0
  %93 = vmatpush1.msra.mxu0 %v68
  %94 = vmatprep.subr.mxu0 0.0
  %95 = vmatpush1.msra.mxu0 %v69
  %96 = vmatprep.subr.mxu0 0.0
  %97 = vmatpush1.msra.mxu0 %v70
  %98 = vmatprep.subr.mxu0 0.0
  %99 = vmatpush1.msra.mxu0 %v71
  %100 = vmatprep.subr.mxu0 0.0
  %101 = vmatpush1.msra.mxu0 %v72
  %102 = vmatprep.subr.mxu0 0.0
  %103 = vmatpush1.msra.mxu0 %v73
  %104 = vmatprep.subr.mxu0 0.0
  %105 = vmatpush1.msra.mxu0 0.0
  %106 = vmatprep.subr.mxu0 0.0
  %107 = vmatpush1.msra.mxu0 0.0
  %108 = vmatprep.subr.mxu0 0.0
  %109 = vmatpush1.msra.mxu0 0.0
  %110 = vmatprep.subr.mxu0 0.0
  %111 = vmatpush1.msra.mxu0 0.0
  %112 = vmatprep.subr.mxu0 0.0
  %113 = vmatpush1.msra.mxu0 0.0
  %114 = vmatprep.subr.mxu0 0.0
  %115 = vmatpush1.msra.mxu0 0.0
  %116 = vmatprep.subr.mxu0 0.0
  %117 = vmatpush1.msra.mxu0 0.0
  %118 = vmatprep.subr.mxu0 0.0
  %119 = vmatpush1.msra.mxu0 0.0
  %120 = vmatprep.subr.mxu0 0.0
  %121 = vmatpush1.msra.mxu0 0.0
  %122 = vmatprep.subr.mxu0 0.0
  %123 = vmatpush1.msra.mxu0 0.0
  %124 = vmatprep.subr.mxu0 0.0
  %125 = vmatpush1.msra.mxu0 0.0
  %126 = vmatprep.subr.mxu0 0.0
  %127 = vmatpush1.msra.mxu0 0.0
  %128 = vmatprep.subr.mxu0 0.0
  %129 = vmatpush1.msra.mxu0 0.0
  %130 = vmatprep.subr.mxu0 0.0
  %131 = vmatpush1.msra.mxu0 0.0
  %132 = vmatprep.subr.mxu0 0.0
  %133 = vmatpush1.msra.mxu0 0.0
  %134 = vmatprep.subr.mxu0 0.0
  %135 = vmatpush1.msra.mxu0 0.0
  %136 = vmatprep.subr.mxu0 0.0
  %137 = vmatpush1.msra.mxu0 0.0
  %138 = vmatprep.subr.mxu0 0.0
  %139 = vmatpush1.msra.mxu0 0.0
  %140 = vmatprep.subr.mxu0 0.0
  %141 = vmatpush1.msra.mxu0 0.0
  %142 = vmatprep.subr.mxu0 0.0
  %143 = vmatpush1.msra.mxu0 0.0
  %144 = vmatprep.subr.mxu0 0.0
  %145 = vmatpush1.msra.mxu0 0.0
  %146 = vmatprep.subr.mxu0 0.0
  %147 = vmatpush1.msra.mxu0 0.0
  %148 = vmatprep.subr.mxu0 0.0
  %149 = vmatpush1.msra.mxu0 0.0
  %150 = vmatprep.subr.mxu0 0.0
  %151 = vmatpush1.msra.mxu0 0.0
  %152 = vmatprep.mubr.f32.mxu0 0.0
  %153 = vmatmul.mubr.f32.gmra.mrb[0].mxu0 %v83
  %v154 = vpop.f32.mrb[0].mxu0
  %v155 = vadd.f32 %v79, %v154
  %v156 = vpop.f32.mrb[0].mxu0
  %157 = vmatprep.mubr.f32.mxu0 0.0
  %158 = vmatmul.mubr.f32.gmra.mrb[0].mxu0 %v86
  %v159 = vpop.f32.mrb[0].mxu0
  %v160 = vadd.f32 %v79, %v159
  %v161 = vpop.f32.mrb[0].mxu0
  %162 = vdwg.mxu0
  %163 = vst [vmem:[%s5] sm:$0xff] %v155
  %164 = vst [vmem:[%s5 + $0x8] sm:$0xff] %v160
  // Predicated region
  $region22: #{mlp_forward.1} parent=0 // pred_check
    _
  $region23: #{mlp_forward.1} parent=0 // pred_check_branch
    %166 = sbr.rel (0) target = $region25
  $region24: #{mlp_forward.1} parent=0 // pred_region
    _
  $region25: #{mlp_forward.1} parent=0 // pred_fallthru
    _
  // Predicated region
  $region26: #{mlp_forward.1} parent=0 // pred_check
    _
  $region27: #{mlp_forward.1} parent=0 // pred_check_branch
    %168 = sbr.rel (0) target = $region29
  $region28: #{mlp_forward.1} parent=0 // pred_region
    _
  $region29: #{mlp_forward.1} parent=0 // pred_fallthru
    _

</llo_original>
